<compile_context>
chip_gen: v7x
topology: tpu7x:2x2x1
jax: 0.10.0
libtpu: 0.0.40
codegen_flags: <defaults>
</compile_context>

<pallas_src>
import jax
import jax.numpy as jnp
from jax.experimental import pallas as pl
from jax.experimental.pallas import tpu as pltpu


def actor_kernel(x_ref, w1_ref, b1_ref, w2_ref, b2_ref, o_ref):
    # fc1 + ReLU.  MXU takes bf16 inputs, accumulates in f32.
    x = x_ref[...].astype(jnp.bfloat16)          # no-op when producer gives bf16
    h = jnp.dot(x, w1_ref[...], preferred_element_type=jnp.float32)
    h = jnp.maximum(h + b1_ref[...], 0.0)        # b1: (1, H_PAD), f32

    # fc2 (padded logit lanes get the -1e30 bias baked into b2).
    logits = jnp.dot(h.astype(jnp.bfloat16), w2_ref[...],
                     preferred_element_type=jnp.float32)
    logits = logits + b2_ref[...]                # (tile_b, A_PAD), f32

    # Numerically-stable softmax over the (padded) action axis; padded lanes
    # contribute exp(-1e30 - m) == 0 to the denominator.
    m = jnp.max(logits, axis=-1, keepdims=True)
    e = jnp.exp(logits - m)
    denom = jnp.sum(e, axis=-1, keepdims=True)
    # approx=False: still on the EUP slot, tight row normalization.
    o_ref[...] = (e * pl.reciprocal(denom, approx=False)).astype(o_ref.dtype)


def _round_up(n, m):
    return ((n + m - 1) // m) * m


def _round_down(n, m):
    return (n // m) * m


# Conservative data budget that fits every generation's scoped VMEM once we
# raise the limit explicitly (v5e default 16 MiB scoped / 128 MiB physical,
# v6e 32/128 MiB, v7x 32/64 MiB).
_VMEM_DATA_BUDGET = 40 << 20


def _choose_tile_b(B, input_size, a_pad, x_itemsize, out_itemsize,
                   weight_bytes, tile_b_cap):
    """Pick the batch tile from an explicit VMEM budget.

    Budget = 2 * tile_b * input_size * x_bytes   (double-buffered x tile)
           + 2 * tile_b * a_pad * out_bytes      (double-buffered out tile)
           + 2 * weight_bytes                    (resident weights; default
                                                  BlockSpec buffering is 2 —
                                                  pl.Buffered(1) could reclaim
                                                  this, left as a sweep).
    """
    if B < 16:
        # Single full-dim block: block_shape == array dim satisfies the
        # (8,128) rule without any batch padding.
        return B
    per_row = 2 * (input_size * x_itemsize + a_pad * out_itemsize)
    budget_rows = (_VMEM_DATA_BUDGET - 2 * weight_bytes) // per_row
    tile = max(8, _round_down(min(tile_b_cap, budget_rows), 8))
    # v7x megacore: guarantee >= 2 grid steps so "parallel" shards the batch
    # across both TensorCores (harmless on single-TC v5e / v6e).
    tile = min(tile, _round_up(pl.cdiv(B, 2), 8))
    return max(8, tile)


def prepare_params(params, seq_len, feat_size):
    """One-time parameter prep: permute w1 rows (folds the transpose(1,2)
    into the weights), pad hidden/action to 128 lanes, cast weights to bf16."""
    w1 = params["w1"]                      # (input_size, hidden), input idx = f*S + s
    b1 = params["b1"]                      # (1, hidden)
    w2 = params["w2"]                      # (hidden, action)
    b2 = params["b2"]                      # (1, action)
    input_size, hidden = w1.shape
    action = w2.shape[1]
    assert input_size == seq_len * feat_size

    # x.transpose(1,2).reshape uses input index k = f*S + s; plain
    # x.reshape(B, S*F) uses j = s*F + f.  Permute rows so the plain reshape
    # works:  w1_perm[s*F + f, :] = w1[f*S + s, :].
    w1_perm = (w1.reshape(feat_size, seq_len, hidden)
                 .transpose(1, 0, 2)
                 .reshape(input_size, hidden))

    # Keep 128-multiple padding (do NOT widen to 256: the kernel is HBM-bound,
    # wider padding doubles bytes/FLOPs for zero throughput gain).
    h_pad = max(128, _round_up(hidden, 128))
    a_pad = max(128, _round_up(action, 128))

    w1_p = jnp.zeros((input_size, h_pad), jnp.bfloat16)
    w1_p = w1_p.at[:, :hidden].set(w1_perm.astype(jnp.bfloat16))
    b1_p = jnp.zeros((1, h_pad), jnp.float32).at[:, :hidden].set(b1.reshape(1, hidden))
    w2_p = jnp.zeros((h_pad, a_pad), jnp.bfloat16)
    w2_p = w2_p.at[:hidden, :action].set(w2.astype(jnp.bfloat16))
    # Padded logit lanes -> -1e30 bias -> exactly zero softmax mass.
    b2_p = jnp.full((1, a_pad), -1e30, jnp.float32).at[:, :action].set(b2.reshape(1, action))

    return {"w1": w1_p, "b1": b1_p, "w2": w2_p, "b2": b2_p, "action_size": action}


def actor_forward(x, prep, *, out_dtype=jnp.bfloat16, tile_b_cap=2048,
                  return_padded=False):
    """x: (B, S, F), ideally already bf16 from the producer (no wrapper-side
    cast is performed -- an un-fused astype would be an extra HBM pass).
    prep: output of prepare_params()."""
    B, S, F = x.shape
    x2 = x.reshape(B, S * F)               # transpose folded into w1 -> no copy

    w1, b1, w2, b2 = prep["w1"], prep["b1"], prep["w2"], prep["b2"]
    input_size, h_pad = w1.shape
    a_pad = w2.shape[1]
    action = prep["action_size"]

    x_itemsize = x2.dtype.itemsize
    out_itemsize = jnp.dtype(out_dtype).itemsize
    weight_bytes = w1.nbytes + b1.nbytes + w2.nbytes + b2.nbytes

    tile_b = _choose_tile_b(B, input_size, a_pad, x_itemsize, out_itemsize,
                            weight_bytes, tile_b_cap)
    # No jnp.pad on the batch axis: Pallas masks the partial last block.
    grid = (pl.cdiv(B, tile_b),)

    vmem_needed = (2 * tile_b * input_size * x_itemsize        # x double-buffer
                   + 2 * tile_b * a_pad * out_itemsize          # out double-buffer
                   + 2 * weight_bytes)                          # resident weights (x2 bufs)
    vmem_limit = min(60 << 20, max(32 << 20, int(vmem_needed) + (4 << 20)))

    cost = pl.CostEstimate(
        flops=2 * B * (input_size * h_pad + h_pad * a_pad),
        transcendentals=B * a_pad,                              # exp
        bytes_accessed=(x2.size * x_itemsize + weight_bytes
                        + B * a_pad * out_itemsize),
    )

    out = pl.pallas_call(
        actor_kernel,
        out_shape=jax.ShapeDtypeStruct((B, a_pad), out_dtype),
        grid=grid,
        in_specs=[
            pl.BlockSpec((tile_b, input_size), lambda i: (i, 0)),  # streamed x tile
            pl.BlockSpec((input_size, h_pad), lambda i: (0, 0)),   # resident w1
            pl.BlockSpec((1, h_pad), lambda i: (0, 0)),            # resident b1
            pl.BlockSpec((h_pad, a_pad), lambda i: (0, 0)),        # resident w2
            pl.BlockSpec((1, a_pad), lambda i: (0, 0)),            # resident b2
        ],
        out_specs=pl.BlockSpec((tile_b, a_pad), lambda i: (i, 0)),
        compiler_params=pltpu.CompilerParams(
            dimension_semantics=("parallel",),
            vmem_limit_bytes=vmem_limit,
        ),
        cost_estimate=cost,
    )(x2, w1, b1, w2, b2)

    if return_padded:
        # Padded lanes [action:] carry exactly zero probability; consuming the
        # padded slab avoids a second HBM pass over the output.
        return out
    return out[:, :action]


def init_params(key, input_size, hidden_size, action_size):
    """Synthetic init mirroring nn.Linear shapes (stored as (in, out))."""
    k1, k2, k3, k4 = jax.random.split(key, 4)
    bound1 = 1.0 / jnp.sqrt(input_size)
    bound2 = 1.0 / jnp.sqrt(hidden_size)
    return {
        "w1": jax.random.uniform(k1, (input_size, hidden_size), jnp.float32,
                                 -bound1, bound1),
        "b1": jax.random.uniform(k2, (1, hidden_size), jnp.float32,
                                 -bound1, bound1),
        "w2": jax.random.uniform(k3, (hidden_size, action_size), jnp.float32,
                                 -bound2, bound2),
        "b2": jax.random.uniform(k4, (1, action_size), jnp.float32,
                                 -bound2, bound2),
        # policy_log_std only feeds the MultivariateNormal sampling path,
        # not forward(); kept for parameter completeness.
        "policy_log_std": jnp.zeros((action_size,), jnp.float32),
    }


def _reference(x, params, batch):
    x_f32 = x.astype(jnp.float32)
    x_flat = jnp.transpose(x_f32, (0, 2, 1)).reshape(batch, -1)
    h = jnp.maximum(x_flat @ params["w1"] + params["b1"], 0.0)
    logits = h @ params["w2"] + params["b2"]
    return jax.nn.softmax(logits, axis=1)


if __name__ == "__main__":
    seq, feat = 8, 4
    input_size = seq * feat          # 32
    hidden_size = 32
    action_size = 4

    key = jax.random.PRNGKey(0)
    kx, kx2, kp = jax.random.split(key, 3)
    params = init_params(kp, input_size, hidden_size, action_size)
    prep = prepare_params(params, seq, feat)

    # --- small batch (single full-dim block) ---
    batch = 2
    # Producer supplies bf16 activations (MXU consumes bf16 anyway).
    x = jax.random.normal(kx, (batch, seq, feat), dtype=jnp.float32).astype(jnp.bfloat16)
    out = jax.block_until_ready(actor_forward(x, prep))
    ref = _reference(x, params, batch)
    assert out.shape == (batch, action_size)
    # bf16 weights/activations/output -> looser tolerance vs f32 reference.
    assert jnp.allclose(out.astype(jnp.float32), ref, atol=2e-2, rtol=0.0)
    assert jnp.allclose(jnp.sum(out.astype(jnp.float32), axis=1), 1.0, atol=2e-2)

    # --- multi-step grid with a masked partial last block (no batch pad) ---
    batch2 = 20
    x2 = jax.random.normal(kx2, (batch2, seq, feat), dtype=jnp.float32).astype(jnp.bfloat16)
    out2 = jax.block_until_ready(actor_forward(x2, prep))
    ref2 = _reference(x2, params, batch2)
    assert out2.shape == (batch2, action_size)
    assert jnp.allclose(out2.astype(jnp.float32), ref2, atol=2e-2, rtol=0.0)
    assert jnp.allclose(jnp.sum(out2.astype(jnp.float32), axis=1), 1.0, atol=2e-2)

    print("KERNEL_OK")
</pallas_src>

<mosaic_0001>
module attributes {stable_mosaic.version = 11 : i64} {
  func.func @actor_kernel(%arg0: i32, %arg1: memref<2x32xbf16, #tpu.memory_space<vmem>>, %arg2: memref<32x128xbf16, #tpu.memory_space<vmem>>, %arg3: memref<1x128xf32, #tpu.memory_space<vmem>>, %arg4: memref<128x128xbf16, #tpu.memory_space<vmem>>, %arg5: memref<1x128xf32, #tpu.memory_space<vmem>>, %arg6: memref<2x128xbf16, #tpu.memory_space<vmem>>) attributes {dimension_semantics = [#tpu.dimension_semantics<parallel>], iteration_bounds = array<i64: 1>, scalar_prefetch = 0 : i64, scratch_operands = 0 : i64, tpu.core_type = #tpu.core_type<tc>, window_params = [{transform_indices = @transform_0, window_bounds = array<i64: 2, 32>}, {pipeline_mode = #tpu.pipeline_mode<synchronous>, transform_indices = @transform_1, window_bounds = array<i64: 32, 128>}, {pipeline_mode = #tpu.pipeline_mode<synchronous>, transform_indices = @transform_2, window_bounds = array<i64: 1, 128>}, {pipeline_mode = #tpu.pipeline_mode<synchronous>, transform_indices = @transform_3, window_bounds = array<i64: 128, 128>}, {pipeline_mode = #tpu.pipeline_mode<synchronous>, transform_indices = @transform_4, window_bounds = array<i64: 1, 128>}, {transform_indices = @transform_5, window_bounds = array<i64: 2, 128>}]} {
    %c0 = arith.constant 0 : index
    %c0_0 = arith.constant 0 : index
    %0 = vector.load %arg1[%c0, %c0_0] : memref<2x32xbf16, #tpu.memory_space<vmem>>, vector<2x32xbf16>
    %c0_1 = arith.constant 0 : index
    %c0_2 = arith.constant 0 : index
    %1 = vector.load %arg2[%c0_1, %c0_2] : memref<32x128xbf16, #tpu.memory_space<vmem>>, vector<32x128xbf16>
    %cst = arith.constant dense<0.000000e+00> : vector<2x128xf32>
    %2 = tpu.matmul %0, %1, %cst {dimension_numbers = #tpu.dot_dimension_numbers<[1], [0], [0], [1], [0, 0, 1, 1], [], []>} : vector<2x32xbf16>, vector<32x128xbf16>, vector<2x128xf32> -> vector<2x128xf32>
    %c0_3 = arith.constant 0 : index
    %c0_4 = arith.constant 0 : index
    %3 = vector.load %arg3[%c0_3, %c0_4] : memref<1x128xf32, #tpu.memory_space<vmem>>, vector<1x128xf32>
    %4 = vector.broadcast %3 : vector<1x128xf32> to vector<2x128xf32>
    %5 = arith.addf %2, %4 : vector<2x128xf32>
    %cst_5 = arith.constant 0.000000e+00 : f32
    %6 = vector.broadcast %cst_5 : f32 to vector<2x128xf32>
    %7 = arith.maximumf %5, %6 : vector<2x128xf32>
    %8 = arith.truncf %7 : vector<2x128xf32> to vector<2x128xbf16>
    %c0_6 = arith.constant 0 : index
    %c0_7 = arith.constant 0 : index
    %9 = vector.load %arg4[%c0_6, %c0_7] : memref<128x128xbf16, #tpu.memory_space<vmem>>, vector<128x128xbf16>
    %cst_8 = arith.constant dense<0.000000e+00> : vector<2x128xf32>
    %10 = tpu.matmul %8, %9, %cst_8 {dimension_numbers = #tpu.dot_dimension_numbers<[1], [0], [0], [1], [0, 0, 1, 1], [], []>} : vector<2x128xbf16>, vector<128x128xbf16>, vector<2x128xf32> -> vector<2x128xf32>
    %c0_9 = arith.constant 0 : index
    %c0_10 = arith.constant 0 : index
    %11 = vector.load %arg5[%c0_9, %c0_10] : memref<1x128xf32, #tpu.memory_space<vmem>>, vector<1x128xf32>
    %12 = vector.broadcast %11 : vector<1x128xf32> to vector<2x128xf32>
    %13 = arith.addf %10, %12 : vector<2x128xf32>
    %cst_11 = arith.constant dense<0xFF800000> : vector<2xf32>
    %14 = vector.multi_reduction <maximumf>, %13, %cst_11 [1] : vector<2x128xf32> to vector<2xf32>
    %15 = vector.shape_cast %14 : vector<2xf32> to vector<2x1xf32>
    %16 = vector.broadcast %15 : vector<2x1xf32> to vector<2x128xf32>
    %17 = arith.subf %13, %16 : vector<2x128xf32>
    %18 = math.exp %17 : vector<2x128xf32>
    %cst_12 = arith.constant dense<0.000000e+00> : vector<2xf32>
    %19 = vector.multi_reduction <add>, %18, %cst_12 [1] : vector<2x128xf32> to vector<2xf32>
    %20 = vector.shape_cast %19 : vector<2xf32> to vector<2x1xf32>
    %21 = tpu.reciprocal %20 : vector<2x1xf32> -> vector<2x1xf32>
    %22 = vector.broadcast %21 : vector<2x1xf32> to vector<2x128xf32>
    %23 = arith.mulf %18, %22 : vector<2x128xf32>
    %24 = arith.truncf %23 : vector<2x128xf32> to vector<2x128xbf16>
    %c0_13 = arith.constant 0 : index
    %c0_14 = arith.constant 0 : index
    %25 = vector.load %arg6[%c0_13, %c0_14] : memref<2x128xbf16, #tpu.memory_space<vmem>>, vector<2x128xbf16>
    tpu.vector_store %arg6[%c0_13, %c0_14], %24 {strides = array<i32>} : memref<2x128xbf16, #tpu.memory_space<vmem>>, vector<2x128xbf16>,
    return
  }
  func.func @transform_0(%arg0: i32) -> (i32, i32) {
    %c0_i32 = arith.constant 0 : i32
    %c0_i32_0 = arith.constant 0 : i32
    return %arg0, %c0_i32 : i32, i32
  }
  func.func @transform_1(%arg0: i32) -> (i32, i32) {
    %c0_i32 = arith.constant 0 : i32
    %c0_i32_0 = arith.constant 0 : i32
    %c0_i32_1 = arith.constant 0 : i32
    return %c0_i32, %c0_i32_0 : i32, i32
  }
  func.func @transform_2(%arg0: i32) -> (i32, i32) {
    %c0_i32 = arith.constant 0 : i32
    %c0_i32_0 = arith.constant 0 : i32
    %c0_i32_1 = arith.constant 0 : i32
    return %c0_i32, %c0_i32_0 : i32, i32
  }
  func.func @transform_3(%arg0: i32) -> (i32, i32) {
    %c0_i32 = arith.constant 0 : i32
    %c0_i32_0 = arith.constant 0 : i32
    %c0_i32_1 = arith.constant 0 : i32
    return %c0_i32, %c0_i32_0 : i32, i32
  }
  func.func @transform_4(%arg0: i32) -> (i32, i32) {
    %c0_i32 = arith.constant 0 : i32
    %c0_i32_0 = arith.constant 0 : i32
    %c0_i32_1 = arith.constant 0 : i32
    return %c0_i32, %c0_i32_0 : i32, i32
  }
  func.func @transform_5(%arg0: i32) -> (i32, i32) {
    %c0_i32 = arith.constant 0 : i32
    %c0_i32_0 = arith.constant 0 : i32
    return %arg0, %c0_i32 : i32, i32
  }
}

</mosaic_0001>

<llo_original>
// kernel: tpu_custom_call.1
$region0: #{tpu_custom_call.1}
  #allocation0 [shape = 'u32[]', space=smem, size = 0x4, offset = 0x4, fixed_abs, tag = 'smem constant byte address 0x4 - core index']
  #allocation1 [shape = 'u32[144,128]{1,0:T(1,128)}', space=vmem, size = 0x12000, scoped, tag = 'internal scratch']
  %s0 = inlined_call_operand.hbm [shape: bf16[2,32], index: 0, kind: input, shape index: {}]
  %s1 = inlined_call_operand.hbm [shape: bf16[32,128], index: 1, kind: input, shape index: {}]
  %s2 = inlined_call_operand.vmem [shape: f32[1,128], index: 2, kind: input, shape index: {}]
  %s3 = inlined_call_operand.hbm [shape: bf16[128,128], index: 3, kind: input, shape index: {}]
  %s4 = inlined_call_operand.vmem [shape: f32[1,128], index: 4, kind: input, shape index: {}]
  %s5 = inlined_call_operand.hbm [shape: bf16[2,128], index: 5, kind: output, shape index: {}]
  %s6 = sld [smem:[#allocation0]]
  $region42: #{tpu_custom_call.1} parent=0
    _
  %s8 = ssub.s32 1, %s6
  %s9 = scalar_select 0, %s8, %s6
  $region1: #{tpu_custom_call.1} parent=0
    #allocation2 [shape = 'u8[512]{0}', space=vmem, size = 0x400, scoped, tag = 'input window, operand 0, single buffered']
    #allocation3 [shape = 's32[1]{0}', space=sflag, size = 0x4, scoped, tag = 'scoped memory for tpu_custom_call.1']
    #allocation4 [shape = 's32[1]{0}', space=sflag, size = 0x4, scoped, tag = 'scoped memory for tpu_custom_call.1']
    #allocation5 [shape = 'u8[8192]{0}', space=vmem, size = 0x2000, scoped, tag = 'input window, operand 1, single buffered']
    #allocation6 [shape = 's32[1]{0}', space=sflag, size = 0x4, scoped, tag = 'scoped memory for tpu_custom_call.1']
    #allocation7 [shape = 'u8[32768]{0}', space=vmem, size = 0x8000, scoped, tag = 'input window, operand 3, single buffered']
    #allocation8 [shape = 'u8[512]{0}', space=vmem, size = 0x400, scoped, tag = 'output window, operand 0, single buffered']
    %10 = vsyncpa [#allocation3], 0
    %11 = vsyncpa [#allocation6], 0
    %12 = vsyncpa [#allocation4], 0
    // Predicated region
    $region2: #{tpu_custom_call.1} parent=1 // pred_check
      _
    $region3: #{tpu_custom_call.1} parent=1 // pred_check_branch
      %14 = sbr.rel (0) target = $region5
    $region4: #{tpu_custom_call.1} parent=1 // pred_region
      %s16 = ssub.s32 16, 16
      %17 = vsyncadd [#allocation3], %s16
      %s19 = sshll.u32 [#allocation2], 4
      %s20 = int_to_ptr.vmem [resolvable:$true] %s19
      %22 = dma.hbm_to_vmem [thread:$0]  %s0, 16, %s20, [#allocation3]
    $region5: #{tpu_custom_call.1} parent=1 // pred_fallthru
      _
    // Predicated region
    $region6: #{tpu_custom_call.1} parent=1 // pred_check
      _
    $region7: #{tpu_custom_call.1} parent=1 // pred_check_branch
      %24 = sbr.rel (0) target = $region9
    $region8: #{tpu_custom_call.1} parent=1 // pred_region
      %s26 = ssub.s32 256, 256
      %27 = vsyncadd [#allocation6], %s26
      %s28 = sshll.u32 [#allocation5], 4
      %s29 = int_to_ptr.vmem [resolvable:$true] %s28
      %34 = dma.hbm_to_vmem [thread:$0]  %s1, 256, %s29, [#allocation6], 64, 64, 4
    $region9: #{tpu_custom_call.1} parent=1 // pred_fallthru
      _
    // Predicated region
    $region10: #{tpu_custom_call.1} parent=1 // pred_check
      _
    $region11: #{tpu_custom_call.1} parent=1 // pred_check_branch
      %36 = sbr.rel (0) target = $region13
    $region12: #{tpu_custom_call.1} parent=1 // pred_region
      _
    $region13: #{tpu_custom_call.1} parent=1 // pred_fallthru
      _
    // Predicated region
    $region14: #{tpu_custom_call.1} parent=1 // pred_check
      _
    $region15: #{tpu_custom_call.1} parent=1 // pred_check_branch
      %38 = sbr.rel (0) target = $region17
    $region16: #{tpu_custom_call.1} parent=1 // pred_region
      %s40 = ssub.s32 1024, 1024
      %41 = vsyncadd [#allocation6], %s40
      %s42 = sshll.u32 [#allocation7], 4
      %s43 = int_to_ptr.vmem [resolvable:$true] %s42
      %48 = dma.hbm_to_vmem [thread:$0]  %s3, 1024, %s43, [#allocation6], 64, 64, 4
    $region17: #{tpu_custom_call.1} parent=1 // pred_fallthru
      _
    // Predicated region
    $region18: #{tpu_custom_call.1} parent=1 // pred_check
      _
    $region19: #{tpu_custom_call.1} parent=1 // pred_check_branch
      %50 = sbr.rel (0) target = $region21
    $region20: #{tpu_custom_call.1} parent=1 // pred_region
      _
    $region21: #{tpu_custom_call.1} parent=1 // pred_fallthru
      _
    // Predicated region
    $region22: #{tpu_custom_call.1} parent=1 // pred_check
      _
    $region23: #{tpu_custom_call.1} parent=1 // pred_check_branch
      %52 = sbr.rel (0) target = $region25
    $region24: #{tpu_custom_call.1} parent=1 // pred_region
      %53 = dma.done [#allocation3], 16
    $region25: #{tpu_custom_call.1} parent=1 // pred_fallthru
      _
    // Predicated region
    $region26: #{tpu_custom_call.1} parent=1 // pred_check
      _
    $region27: #{tpu_custom_call.1} parent=1 // pred_check_branch
      %55 = sbr.rel (0) target = $region29
    $region28: #{tpu_custom_call.1} parent=1 // pred_region
      %56 = dma.done [#allocation6], 256
    $region29: #{tpu_custom_call.1} parent=1 // pred_fallthru
      _
    // Predicated region
    $region30: #{tpu_custom_call.1} parent=1 // pred_check
      _
    $region31: #{tpu_custom_call.1} parent=1 // pred_check_branch
      %58 = sbr.rel (0) target = $region33
    $region32: #{tpu_custom_call.1} parent=1 // pred_region
      %59 = dma.done [#allocation6], 1024
    $region33: #{tpu_custom_call.1} parent=1 // pred_fallthru
      _
    %v61 = vld [vmem:[#allocation2] sm:$0x1]
    %v62 = vld [vmem:[#allocation5] sm:$0xf]
    %v63 = vld [vmem:[#allocation5 + $0x4] sm:$0xf]
    %v64 = vld [vmem:[#allocation5 + $0x8] sm:$0xf]
    %v65 = vld [vmem:[#allocation5 + $0xc] sm:$0xf]
    %v66 = vld [vmem:[%s2] sm:$0x1]
    %v68 = vlaneseq
    %v69 = vshrl.u32 %v68, 7
    %v70 = vsub.s32 0, %v69
    %v71 = vrot.slane %v66, %v70
    %v77 = vunpack.c.l.b16 %v62
    %v78 = vunpack.c.l.b16 %v63
    %v79 = vunpack.c.l.b16 %v64
    %v80 = vunpack.c.l.b16 %v65
    %v81 = vpack.c.b16 %v78, %v77
    %v82 = vpack.c.b16 %v80, %v79
    %vm85 = vcmask 261120
    %v87 = vsel %vm85, %v61, 0
    %89 = vmatprep.subr.bf16.mxu0 0
    %90 = vmatpush1.bf16.msra.mxu0 %v81
    %91 = vmatprep.subr.bf16.mxu0 0
    %92 = vmatpush1.bf16.msra.mxu0 %v82
    %93 = vmatprep.subr.bf16.mxu0 0
    %94 = vmatpush1.bf16.msra.mxu0 0
    %95 = vmatprep.subr.bf16.mxu0 0
    %96 = vmatpush1.bf16.msra.mxu0 0
    %97 = vmatprep.subr.bf16.mxu0 0
    %98 = vmatpush1.bf16.msra.mxu0 0
    %99 = vmatprep.subr.bf16.mxu0 0
    %100 = vmatpush1.bf16.msra.mxu0 0
    %101 = vmatprep.subr.bf16.mxu0 0
    %102 = vmatpush1.bf16.msra.mxu0 0
    %103 = vmatprep.subr.bf16.mxu0 0
    %104 = vmatpush1.bf16.msra.mxu0 0
    %105 = vmatprep.subr.bf16.mxu0 0
    %106 = vmatpush1.bf16.msra.mxu0 0
    %107 = vmatprep.subr.bf16.mxu0 0
    %108 = vmatpush1.bf16.msra.mxu0 0
    %109 = vmatprep.subr.bf16.mxu0 0
    %110 = vmatpush1.bf16.msra.mxu0 0
    %111 = vmatprep.subr.bf16.mxu0 0
    %112 = vmatpush1.bf16.msra.mxu0 0
    %113 = vmatprep.subr.bf16.mxu0 0
    %114 = vmatpush1.bf16.msra.mxu0 0
    %115 = vmatprep.subr.bf16.mxu0 0
    %116 = vmatpush1.bf16.msra.mxu0 0
    %117 = vmatprep.subr.bf16.mxu0 0
    %118 = vmatpush1.bf16.msra.mxu0 0
    %119 = vmatprep.subr.bf16.mxu0 0
    %120 = vmatpush1.bf16.msra.mxu0 0
    %121 = vmatprep.mubr.bf16.mxu0 0
    %122 = vmatmul.mubr.bf16.gmra.mrb[0].mxu0 %v87
    %v123 = vpop.f32.mrb[0].mxu0
    %v124 = vadd.f32 %v71, %v123
    %v125 = vpop.f32.mrb[0].mxu0
    %v126 = vpop.f32.mrb[0].mxu0
    %v127 = vpop.f32.mrb[0].mxu0
    %128 = vdwg.mxu0
    %v129 = vmax.f32 %v124, 0.0
    %v130 = vpack.c.bf16 %v129, %v129
    %v131 = vld [vmem:[#allocation7] sm:$0xf]
    %v132 = vld [vmem:[#allocation7 + $0x4] sm:$0xf]
    %v133 = vld [vmem:[#allocation7 + $0x8] sm:$0xf]
    %v134 = vld [vmem:[#allocation7 + $0xc] sm:$0xf]
    %v135 = vld [vmem:[#allocation7 + $0x10] sm:$0xf]
    %v136 = vld [vmem:[#allocation7 + $0x14] sm:$0xf]
    %v137 = vld [vmem:[#allocation7 + $0x18] sm:$0xf]
    %v138 = vld [vmem:[#allocation7 + $0x1c] sm:$0xf]
    %v139 = vld [vmem:[#allocation7 + $0x20] sm:$0xf]
    %v140 = vld [vmem:[#allocation7 + $0x24] sm:$0xf]
    %v141 = vld [vmem:[#allocation7 + $0x28] sm:$0xf]
    %v142 = vld [vmem:[#allocation7 + $0x2c] sm:$0xf]
    %v143 = vld [vmem:[#allocation7 + $0x30] sm:$0xf]
    %v144 = vld [vmem:[#allocation7 + $0x34] sm:$0xf]
    %v145 = vld [vmem:[#allocation7 + $0x38] sm:$0xf]
    %v146 = vld [vmem:[#allocation7 + $0x3c] sm:$0xf]
    %v147 = vld [vmem:[%s4] sm:$0x1]
    %v149 = vlaneseq
    %v150 = vshrl.u32 %v149, 7
    %v151 = vsub.s32 0, %v150
    %v152 = vrot.slane %v147, %v151
    %v170 = vunpack.c.l.b16 %v131
    %v171 = vunpack.c.l.b16 %v132
    %v172 = vunpack.c.l.b16 %v133
    %v173 = vunpack.c.l.b16 %v134
    %v174 = vunpack.c.l.b16 %v135
    %v175 = vunpack.c.l.b16 %v136
    %v176 = vunpack.c.l.b16 %v137
    %v177 = vunpack.c.l.b16 %v138
    %v178 = vunpack.c.l.b16 %v139
    %v179 = vunpack.c.l.b16 %v140
    %v180 = vunpack.c.l.b16 %v141
    %v181 = vunpack.c.l.b16 %v142
    %v182 = vunpack.c.l.b16 %v143
    %v183 = vunpack.c.l.b16 %v144
    %v184 = vunpack.c.l.b16 %v145
    %v185 = vunpack.c.l.b16 %v146
    %v186 = vpack.c.b16 %v171, %v170
    %v187 = vpack.c.b16 %v173, %v172
    %v188 = vpack.c.b16 %v175, %v174
    %v189 = vpack.c.b16 %v177, %v176
    %v190 = vpack.c.b16 %v179, %v178
    %v191 = vpack.c.b16 %v181, %v180
    %v192 = vpack.c.b16 %v183, %v182
    %v193 = vpack.c.b16 %v185, %v184
    %202 = vmatprep.subr.bf16.mxu0 0
    %203 = vmatpush1.bf16.msra.mxu0 %v186
    %204 = vmatprep.subr.bf16.mxu0 0
    %205 = vmatpush1.bf16.msra.mxu0 %v187
    %206 = vmatprep.subr.bf16.mxu0 0
    %207 = vmatpush1.bf16.msra.mxu0 %v188
    %208 = vmatprep.subr.bf16.mxu0 0
    %209 = vmatpush1.bf16.msra.mxu0 %v189
    %210 = vmatprep.subr.bf16.mxu0 0
    %211 = vmatpush1.bf16.msra.mxu0 %v190
    %212 = vmatprep.subr.bf16.mxu0 0
    %213 = vmatpush1.bf16.msra.mxu0 %v191
    %214 = vmatprep.subr.bf16.mxu0 0
    %215 = vmatpush1.bf16.msra.mxu0 %v192
    %216 = vmatprep.subr.bf16.mxu0 0
    %217 = vmatpush1.bf16.msra.mxu0 %v193
    %218 = vmatprep.subr.bf16.mxu0 0
    %219 = vmatpush1.bf16.msra.mxu0 0
    %220 = vmatprep.subr.bf16.mxu0 0
    %221 = vmatpush1.bf16.msra.mxu0 0
    %222 = vmatprep.subr.bf16.mxu0 0
    %223 = vmatpush1.bf16.msra.mxu0 0
    %224 = vmatprep.subr.bf16.mxu0 0
    %225 = vmatpush1.bf16.msra.mxu0 0
    %226 = vmatprep.subr.bf16.mxu0 0
    %227 = vmatpush1.bf16.msra.mxu0 0
    %228 = vmatprep.subr.bf16.mxu0 0
    %229 = vmatpush1.bf16.msra.mxu0 0
    %230 = vmatprep.subr.bf16.mxu0 0
    %231 = vmatpush1.bf16.msra.mxu0 0
    %232 = vmatprep.subr.bf16.mxu0 0
    %233 = vmatpush1.bf16.msra.mxu0 0
    %234 = vmatprep.mubr.bf16.mxu0 0
    %235 = vmatmul.mubr.bf16.gmra.mrb[0].mxu0 %v130
    %v236 = vpop.f32.mrb[0].mxu0
    %v237 = vadd.f32 %v152, %v236
    %v238 = vpop.f32.mrb[0].mxu0
    %v239 = vpop.f32.mrb[0].mxu0
    %v240 = vpop.f32.mrb[0].mxu0
    %241 = vdwg.mxu0
    %vm242 = vcmask 1041408
    %v243 = vsel %vm242, %v237, -inf
    %244 = vmax.xlane.f32.xlu0 %v243
    %v245 = vpop.xlane.xlu0 %244
    %v246 = vsub.f32 %v237, %v245
    %v247 = vmul.f32 %v246, 1.442695
    %v248 = vpow.pop %v247
    %v249 = vsel %vm242, %v248, 0.0
    %250 = vadd.xlane.f32.xlu0 %v249
    %v251 = vpop.xlane.xlu0 %250
    %v252 = vrcp.pop %v251
    %v253 = vmul.f32 %v248, %v252
    %v254 = vpack.c.bf16 %v253, %v253
    %255 = vst [vmem:[#allocation8] sm:$0x1] %v254
    // Predicated region
    $region34: #{tpu_custom_call.1} parent=1 // pred_check
      _
    $region35: #{tpu_custom_call.1} parent=1 // pred_check_branch
      %257 = sbr.rel (0) target = $region37
    $region36: #{tpu_custom_call.1} parent=1 // pred_region
      %s259 = ssub.s32 16, 16
      %260 = vsyncadd [#allocation4], %s259
      %s262 = sshll.u32 [#allocation8], 4
      %s263 = int_to_ptr.vmem [resolvable:$true] %s262
      %265 = dma.vmem_to_hbm [thread:$0]  %s263, 16, %s5, [#allocation4]
    $region37: #{tpu_custom_call.1} parent=1 // pred_fallthru
      _
    // Predicated region
    $region38: #{tpu_custom_call.1} parent=1 // pred_check
      _
    $region39: #{tpu_custom_call.1} parent=1 // pred_check_branch
      %267 = sbr.rel (0) target = $region41
    $region40: #{tpu_custom_call.1} parent=1 // pred_region
      %268 = dma.done [#allocation4], 16
    $region41: #{tpu_custom_call.1} parent=1 // pred_fallthru
      _
    %269 = vsyncpa [#allocation3], 1
    %270 = vsyncpa [#allocation6], 1
    %271 = vsyncpa [#allocation4], 1

</llo_original>
